<compile_context>
chip_gen: v5e
topology: v5e:2x2
jax: 0.10.0
libtpu: 0.0.40
codegen_flags: <defaults>
</compile_context>

<pallas_src>
import functools

import jax
import jax.numpy as jnp
from jax import lax
from jax.experimental import pallas as pl
from jax.experimental.pallas import tpu as pltpu


def _round_up(x, m):
    return (x + m - 1) // m * m


def _vmem_capacity_bytes():
    """Physical VMEM per TensorCore; conservative fallback if unavailable."""
    try:
        return int(pltpu.get_tpu_info().vmem_capacity_bytes)
    except Exception:
        return 64 * 1024 * 1024  # v7x-sized (smallest of the supported gens)


def _ce_kernel(logits_ref, targets_ref, out_ref, *, n_total, block_n,
               blocks_per_chunk, needs_row_mask):
    p = pl.program_id(0)  # parallel chunk (split across TensorCores on v7x)
    g = pl.program_id(1)  # sequential block within the chunk

    # Zero this chunk's resident partial-sum block on its first step.
    @pl.when(g == 0)
    def _():
        out_ref[...] = jnp.zeros_like(out_ref)

    # Load the tile in its native (wire) dtype; do math in f32.
    logits = logits_ref[...].astype(jnp.float32)               # (TN, C)
    targets = targets_ref[...]                                 # (TN, 1) int32
    tn, c = logits.shape

    # Numerically stable log-sum-exp along the class axis.
    row_max = jnp.max(logits, axis=-1, keepdims=True)           # (TN, 1)
    shifted = logits - row_max                                  # (TN, C)
    lse = jnp.log(jnp.sum(jnp.exp(shifted), axis=-1, keepdims=True))  # (TN, 1)

    # Fused target pick via a compare+select (no dynamic gather / onehot /
    # log_probs temporaries on the vector path).
    col_ids = lax.broadcasted_iota(jnp.int32, (tn, c), 1)       # (TN, C)
    picked = jnp.sum(jnp.where(col_ids == targets, shifted, 0.0),
                     axis=-1, keepdims=True)                    # (TN, 1)
    row_loss = lse - picked                                     # (TN, 1)

    if needs_row_mask:
        block_start = (p * blocks_per_chunk + g) * block_n
        is_full = block_start + block_n <= n_total

        @pl.when(is_full)
        def _():
            out_ref[...] += jnp.sum(row_loss, axis=0, keepdims=True)

        @pl.when(jnp.logical_not(is_full))
        def _():
            # Only the straddling tile pays for the iota/compare/select.
            # Keep this a select (jnp.where): padded rows hold undefined data
            # whose NaN/Inf intermediates must be dropped, not multiplied.
            row_ids = block_start + lax.broadcasted_iota(jnp.int32, (tn, 1), 0)
            masked = jnp.where(row_ids < n_total, row_loss, 0.0)
            out_ref[...] += jnp.sum(masked, axis=0, keepdims=True)
    else:
        out_ref[...] += jnp.sum(row_loss, axis=0, keepdims=True)


def cross_entropy_pallas(logits, targets, *, block_n=None, reduction="mean"):
    """F.cross_entropy(logits, targets, weight=None) via Pallas on TPU.

    block_n=None derives the batch tile from the per-generation VMEM budget.
    """
    if reduction not in ("mean", "sum"):
        raise NotImplementedError("only reduction='mean'/'sum' supported")

    n, c = logits.shape
    targets2d = targets.astype(jnp.int32).reshape(n, 1)
    itemsize = jnp.dtype(logits.dtype).itemsize

    # ---- generation-aware tile / VMEM budget ------------------------------
    vmem_cap = _vmem_capacity_bytes()
    # ~48 MiB-class budget on v7x (64 MiB physical), ~96-100 MiB on v5e/v6e.
    gen_budget = min(int(vmem_cap * 0.75), 100 * 1024 * 1024)

    c_pad = _round_up(c, 128)
    # Double-buffered logits tile + double-buffered lane-padded (bn,1) int32
    # targets tile (pads to 128 lanes -> 512 B/row of VMEM, folded into the
    # budget here) + headroom for in-kernel f32 (bn, c_pad) temporaries.
    per_row_buf = 2 * (c_pad * itemsize + 128 * 4)
    per_row_tmp = 4 * c_pad * 4
    per_row = per_row_buf + per_row_tmp

    if block_n is None:
        bn = (gen_budget // per_row) // 8 * 8
        bn = max(8, min(bn, 8192))  # multi-MiB logits tile; roofline plateau
    else:
        bn = int(block_n)
    bn = n if bn >= n else max(8, (bn // 8) * 8)

    vmem_limit = bn * per_row + (2 << 20)
    vmem_limit = int(min(max(vmem_limit, 16 << 20), vmem_cap - (4 << 20)))

    # ---- grid: (parallel chunks) x (sequential blocks) --------------------
    total_blocks = pl.cdiv(n, bn)
    # Split exactly-even block counts 2-way so v7x's two TensorCores each get
    # their own chunk; on 1-TC chips the extra axis is a harmless outer loop.
    num_chunks = 2 if (total_blocks >= 2 and total_blocks % 2 == 0) else 1
    blocks_per_chunk = total_blocks // num_chunks
    needs_row_mask = (n % bn) != 0

    kernel = functools.partial(
        _ce_kernel, n_total=n, block_n=bn,
        blocks_per_chunk=blocks_per_chunk, needs_row_mask=needs_row_mask)

    cost = pl.CostEstimate(
        flops=6 * n * c,
        transcendentals=n * c + n,
        bytes_accessed=n * c * itemsize + n * 4 + num_chunks * 128 * 4)

    partials = pl.pallas_call(
        kernel,
        out_shape=jax.ShapeDtypeStruct((1, 128 * num_chunks), jnp.float32),
        grid_spec=pltpu.PrefetchScalarGridSpec(
            num_scalar_prefetch=0,
            grid=(num_chunks, blocks_per_chunk),
            in_specs=[
                pl.BlockSpec((bn, c), lambda p, g: (p * blocks_per_chunk + g, 0)),
                pl.BlockSpec((bn, 1), lambda p, g: (p * blocks_per_chunk + g, 0)),
            ],
            # Lane-dense (1, 128) per-chunk output slab; chunk p owns lanes
            # [p*128, (p+1)*128).  Every lane of a slab holds the same partial.
            out_specs=pl.BlockSpec((1, 128), lambda p, g: (0, p)),
        ),
        compiler_params=pltpu.CompilerParams(
            dimension_semantics=("parallel", "arbitrary"),
            vmem_limit_bytes=vmem_limit,
        ),
        cost_estimate=cost,
    )(logits, targets2d)

    per_chunk = partials.reshape(num_chunks, 128)[:, 0]
    total = jnp.sum(per_chunk)
    if reduction == "mean":
        total = total / jnp.float32(n)
    return total


if __name__ == "__main__":
    key = jax.random.PRNGKey(0)
    k_logits, k_targets = jax.random.split(key)

    # CIFAR-100-ish small shapes; N chosen not to divide the small tile so the
    # partial-tile mask path is exercised.
    N, C = 50, 100
    logits = jax.random.normal(k_logits, (N, C), dtype=jnp.float32)
    targets = jax.random.randint(k_targets, (N,), 0, C, dtype=jnp.int32)

    # Reference: pure JAX mean cross-entropy.
    logp = jax.nn.log_softmax(logits, axis=-1)
    ref = -jnp.mean(logp[jnp.arange(N), targets])

    # 1) Auto (VMEM-budgeted) tile: single full-batch block at this scale.
    loss_auto = jax.block_until_ready(cross_entropy_pallas(logits, targets))
    # 2) Small explicit tile: exercises the multi-step grid, the 2-way
    #    parallel chunk split and the gated partial-tile row mask.
    loss_tiled = jax.block_until_ready(
        cross_entropy_pallas(logits, targets, block_n=16))

    assert jnp.allclose(loss_auto, ref, atol=1e-5, rtol=1e-5), (loss_auto, ref)
    assert jnp.allclose(loss_tiled, ref, atol=1e-5, rtol=1e-5), (loss_tiled, ref)

    print("KERNEL_OK")
</pallas_src>

<mosaic_0001>
module attributes {stable_mosaic.version = 11 : i64} {
  func.func @_ce_kernel(%arg0: i32, %arg1: i32, %arg2: memref<50x100xf32, #tpu.memory_space<vmem>>, %arg3: memref<50x1xi32, #tpu.memory_space<vmem>>, %arg4: memref<1x128xf32, #tpu.memory_space<vmem>>) attributes {dimension_semantics = [#tpu.dimension_semantics<parallel>, #tpu.dimension_semantics<arbitrary>], iteration_bounds = array<i64: 1, 1>, scalar_prefetch = 0 : i64, scratch_operands = 0 : i64, tpu.core_type = #tpu.core_type<tc>, window_params = [{transform_indices = @transform_0, window_bounds = array<i64: 50, 100>}, {transform_indices = @transform_1, window_bounds = array<i64: 50, 1>}, {transform_indices = @transform_2, window_bounds = array<i64: 1, 128>}]} {
    %c0_i32 = arith.constant 0 : i32
    %0 = arith.cmpi eq, %arg1, %c0_i32 : i32
    %1 = arith.extui %0 : i1 to i32
    %c0_i32_0 = arith.constant 0 : i32
    %2 = arith.cmpi ne, %1, %c0_i32_0 : i32
    scf.if %2 {
      %cst_12 = arith.constant 0.000000e+00 : f32
      %27 = vector.broadcast %cst_12 : f32 to vector<1x128xf32>
      %c0_13 = arith.constant 0 : index
      %c0_14 = arith.constant 0 : index
      %28 = vector.load %arg4[%c0_13, %c0_14] : memref<1x128xf32, #tpu.memory_space<vmem>>, vector<1x128xf32>
      tpu.vector_store %arg4[%c0_13, %c0_14], %27 {strides = array<i32>} : memref<1x128xf32, #tpu.memory_space<vmem>>, vector<1x128xf32>,
    } else {
    }
    %c0 = arith.constant 0 : index
    %c0_1 = arith.constant 0 : index
    %3 = vector.load %arg2[%c0, %c0_1] : memref<50x100xf32, #tpu.memory_space<vmem>>, vector<50x100xf32>
    %c0_2 = arith.constant 0 : index
    %c0_3 = arith.constant 0 : index
    %4 = vector.load %arg3[%c0_2, %c0_3] : memref<50x1xi32, #tpu.memory_space<vmem>>, vector<50x1xi32>
    %cst = arith.constant dense<0xFF800000> : vector<50xf32>
    %5 = vector.multi_reduction <maximumf>, %3, %cst [1] : vector<50x100xf32> to vector<50xf32>
    %6 = vector.shape_cast %5 : vector<50xf32> to vector<50x1xf32>
    %7 = vector.broadcast %6 : vector<50x1xf32> to vector<50x100xf32>
    %8 = arith.subf %3, %7 : vector<50x100xf32>
    %9 = math.exp %8 : vector<50x100xf32>
    %cst_4 = arith.constant dense<0.000000e+00> : vector<50xf32>
    %10 = vector.multi_reduction <add>, %9, %cst_4 [1] : vector<50x100xf32> to vector<50xf32>
    %11 = vector.shape_cast %10 : vector<50xf32> to vector<50x1xf32>
    %12 = math.log %11 : vector<50x1xf32>
    %13 = tpu.iota {dimensions = array<i32: 1>} : vector<50x100xi32>
    %14 = vector.broadcast %4 : vector<50x1xi32> to vector<50x100xi32>
    %15 = arith.cmpi eq, %13, %14 : vector<50x100xi32>
    %cst_5 = arith.constant 0.000000e+00 : f32
    %16 = vector.broadcast %cst_5 : f32 to vector<50x100xf32>
    %17 = arith.select %15, %8, %16 : vector<50x100xi1>, vector<50x100xf32>
    %cst_6 = arith.constant dense<0.000000e+00> : vector<50xf32>
    %18 = vector.multi_reduction <add>, %17, %cst_6 [1] : vector<50x100xf32> to vector<50xf32>
    %19 = vector.shape_cast %18 : vector<50xf32> to vector<50x1xf32>
    %20 = arith.subf %12, %19 : vector<50x1xf32>
    %c0_7 = arith.constant 0 : index
    %c0_8 = arith.constant 0 : index
    %21 = vector.load %arg4[%c0_7, %c0_8] : memref<1x128xf32, #tpu.memory_space<vmem>>, vector<1x128xf32>
    %cst_9 = arith.constant dense<0.000000e+00> : vector<1xf32>
    %22 = vector.multi_reduction <add>, %20, %cst_9 [0] : vector<50x1xf32> to vector<1xf32>
    %23 = vector.shape_cast %22 : vector<1xf32> to vector<1x1xf32>
    %24 = vector.broadcast %23 : vector<1x1xf32> to vector<1x128xf32>
    %25 = arith.addf %21, %24 : vector<1x128xf32>
    %c0_10 = arith.constant 0 : index
    %c0_11 = arith.constant 0 : index
    %26 = vector.load %arg4[%c0_10, %c0_11] : memref<1x128xf32, #tpu.memory_space<vmem>>, vector<1x128xf32>
    tpu.vector_store %arg4[%c0_10, %c0_11], %25 {strides = array<i32>} : memref<1x128xf32, #tpu.memory_space<vmem>>, vector<1x128xf32>,
    return
  }
  func.func @transform_0(%arg0: i32, %arg1: i32) -> (i32, i32) {
    %c1_i32 = arith.constant 1 : i32
    %0 = arith.muli %arg0, %c1_i32 : i32
    %1 = arith.addi %0, %arg1 : i32
    %c0_i32 = arith.constant 0 : i32
    %c0_i32_0 = arith.constant 0 : i32
    return %1, %c0_i32 : i32, i32
  }
  func.func @transform_1(%arg0: i32, %arg1: i32) -> (i32, i32) {
    %c1_i32 = arith.constant 1 : i32
    %0 = arith.muli %arg0, %c1_i32 : i32
    %1 = arith.addi %0, %arg1 : i32
    %c0_i32 = arith.constant 0 : i32
    %c0_i32_0 = arith.constant 0 : i32
    return %1, %c0_i32 : i32, i32
  }
  func.func @transform_2(%arg0: i32, %arg1: i32) -> (i32, i32) {
    %c0_i32 = arith.constant 0 : i32
    %c0_i32_0 = arith.constant 0 : i32
    return %c0_i32, %arg0 : i32, i32
  }
}

</mosaic_0001>

<llo_original>
// kernel: tpu_custom_call.1
$region0: #{tpu_custom_call.1}
  #allocation0 [shape = 'u32[]', space=smem, size = 0x4, offset = 0x4, fixed_abs, tag = 'smem constant byte address 0x4 - core index']
  #allocation1 [shape = 'u32[72,128]{1,0:T(1,128)}', space=vmem, size = 0x9000, scoped, tag = 'internal scratch']
  %s0 = inlined_call_operand.vmem [shape: f32[50,100], index: 0, kind: input, shape index: {}]
  %s1 = inlined_call_operand.vmem [shape: s32[50,1], index: 1, kind: input, shape index: {}]
  %s2 = inlined_call_operand.hbm [shape: f32[1,128], index: 2, kind: output, shape index: {}]
  %s3 = sld [smem:[#allocation0]]
  $region22: #{tpu_custom_call.1} parent=0
    _
  %s5 = ssub.s32 1, %s3
  %s6 = scalar_select 0, %s5, %s3
  $region1: #{tpu_custom_call.1} parent=0
    #allocation2 [shape = 'u8[512]{0}', space=vmem, size = 0x400, scoped, tag = 'output window, operand 0, single buffered']
    #allocation3 [shape = 's32[1]{0}', space=sflag, size = 0x4, scoped, tag = 'scoped memory for tpu_custom_call.1']
    %7 = vsyncpa [#allocation3], 0
    // Predicated region
    $region2: #{tpu_custom_call.1} parent=1 // pred_check
      _
    $region3: #{tpu_custom_call.1} parent=1 // pred_check_branch
      %9 = sbr.rel (0) target = $region5
    $region4: #{tpu_custom_call.1} parent=1 // pred_region
      %s10 = sadd.s32 0, 0
      %s11 = smul.u32 7, %s10
      %p12 = scmp.lt.s32.totalorder %s11, 6
      %s13 = scalar_select %p12, %s11, 6
      %s14 = smul.addr %s13, 8
      %s15 = scalar_lea.vmem %s0, %s14
      %s16 = sadd.s32 0, 0
      %s17 = smul.u32 7, %s16
    $region5: #{tpu_custom_call.1} parent=1 // pred_fallthru
      _
    // Predicated region
    $region6: #{tpu_custom_call.1} parent=1 // pred_check
      _
    $region7: #{tpu_custom_call.1} parent=1 // pred_check_branch
      %19 = sbr.rel (0) target = $region9
    $region8: #{tpu_custom_call.1} parent=1 // pred_region
      %s20 = sadd.s32 0, 0
      %s21 = smul.u32 7, %s20
      %p22 = scmp.lt.s32.totalorder %s21, 6
      %s23 = scalar_select %p22, %s21, 6
      %s24 = smul.addr %s23, 8
      %s25 = scalar_lea.vmem %s1, %s24
      %s26 = sadd.s32 0, 0
      %s27 = smul.u32 7, %s26
    $region9: #{tpu_custom_call.1} parent=1 // pred_fallthru
      _
    %s28 = sadd.s32 0, 0
    %s29 = smul.u32 7, %s28
    %p30 = scmp.lt.s32.totalorder %s29, 6
    %s31 = scalar_select %p30, %s29, 6
    %s32 = smul.addr %s31, 8
    %s33 = scalar_lea.vmem %s0, %s32
    %s34 = sadd.s32 0, 0
    %s35 = smul.u32 7, %s34
    %p36 = scmp.lt.s32.totalorder %s35, 6
    %s37 = scalar_select %p36, %s35, 6
    %s38 = smul.addr %s37, 8
    %s39 = scalar_lea.vmem %s1, %s38
    %s40 = sadd.s32 0, 0
    %s41 = smul.u32 7, %s40
    %p42 = scmp.lt.s32.totalorder %s41, 6
    %s43 = scalar_select %p42, %s41, 6
    %s44 = smul.addr %s43, 8
    %s45 = scalar_lea.vmem %s0, %s44
    %s46 = sadd.s32 0, 0
    %s47 = smul.u32 7, %s46
    %s48 = sadd.s32 0, 0
    %s49 = smul.u32 7, %s48
    %p50 = scmp.lt.s32.totalorder %s49, 6
    %s51 = scalar_select %p50, %s49, 6
    %s52 = smul.addr %s51, 8
    %s53 = scalar_lea.vmem %s1, %s52
    %s54 = sadd.s32 0, 0
    %s55 = smul.u32 7, %s54
    %p56 = scmp.eq.s32.totalorder 0, 0
    // Predicated region
    $region10: #{tpu_custom_call.1} parent=1 // pred_check
      %p57 = pneg %p56
    $region11: #{tpu_custom_call.1} parent=1 // pred_check_branch
      %59 = sbr.rel (%p57) target = $region13
    $region12: #{tpu_custom_call.1} parent=1 // pred_region
      %60 = vst [vmem:[#allocation2] sm:$0x1] 0.0
    $region13: #{tpu_custom_call.1} parent=1 // pred_fallthru
      _
    %v61 = vld [vmem:[%s45] sm:$0xff]
    %v62 = vld [vmem:[%s45 + $0x8] sm:$0xff]
    %v63 = vld [vmem:[%s45 + $0x10] sm:$0xff]
    %v64 = vld [vmem:[%s45 + $0x18] sm:$0xff]
    %v65 = vld [vmem:[%s45 + $0x20] sm:$0xff]
    %v66 = vld [vmem:[%s45 + $0x28] sm:$0xff]
    %v67 = vld [vmem:[%s45 + $0x30] sm:$0x3]
    %v68 = vld [vmem:[%s53] sm:$0xff]
    %v69 = vld [vmem:[%s53 + $0x8] sm:$0xff]
    %v70 = vld [vmem:[%s53 + $0x10] sm:$0xff]
    %v71 = vld [vmem:[%s53 + $0x18] sm:$0xff]
    %v72 = vld [vmem:[%s53 + $0x20] sm:$0xff]
    %v73 = vld [vmem:[%s53 + $0x28] sm:$0xff]
    %v74 = vld [vmem:[%s53 + $0x30] sm:$0x3]
    %vm75 = vcmask 818176
    %v76 = vsel %vm75, %v61, -inf
    %77 = vmax.xlane.f32.xlu0 %v76
    %v78 = vpop.xlane.xlu0 %77
    %v79 = vsel %vm75, %v62, -inf
    %80 = vmax.xlane.f32.xlu0 %v79
    %v81 = vpop.xlane.xlu0 %80
    %v82 = vsel %vm75, %v63, -inf
    %83 = vmax.xlane.f32.xlu0 %v82
    %v84 = vpop.xlane.xlu0 %83
    %v85 = vsel %vm75, %v64, -inf
    %86 = vmax.xlane.f32.xlu0 %v85
    %v87 = vpop.xlane.xlu0 %86
    %v88 = vsel %vm75, %v65, -inf
    %89 = vmax.xlane.f32.xlu0 %v88
    %v90 = vpop.xlane.xlu0 %89
    %v91 = vsel %vm75, %v66, -inf
    %92 = vmax.xlane.f32.xlu0 %v91
    %v93 = vpop.xlane.xlu0 %92
    %vm94 = vcmask 812032
    %v95 = vsel %vm94, %v67, -inf
    %96 = vmax.xlane.f32.xlu0 %v95
    %v97 = vpop.xlane.xlu0 %96
    %v98 = vsub.f32 %v61, %v78
    %v99 = vsub.f32 %v62, %v81
    %v100 = vsub.f32 %v63, %v84
    %v101 = vsub.f32 %v64, %v87
    %v102 = vsub.f32 %v65, %v90
    %v103 = vsub.f32 %v66, %v93
    %v104 = vsub.f32 %v67, %v97
    %v105 = vmul.f32 %v98, 1.442695
    %v106 = vpow.pop %v105
    %v107 = vmul.f32 %v99, 1.442695
    %v108 = vpow.pop %v107
    %v109 = vmul.f32 %v100, 1.442695
    %v110 = vpow.pop %v109
    %v111 = vmul.f32 %v101, 1.442695
    %v112 = vpow.pop %v111
    %v113 = vmul.f32 %v102, 1.442695
    %v114 = vpow.pop %v113
    %v115 = vmul.f32 %v103, 1.442695
    %v116 = vpow.pop %v115
    %v117 = vmul.f32 %v104, 1.442695
    %v118 = vpow.pop %v117
    %v119 = vsel %vm75, %v106, 0.0
    %120 = vadd.xlane.f32.xlu0 %v119
    %v121 = vpop.xlane.xlu0 %120
    %v122 = vsel %vm75, %v108, 0.0
    %123 = vadd.xlane.f32.xlu0 %v122
    %v124 = vpop.xlane.xlu0 %123
    %v125 = vsel %vm75, %v110, 0.0
    %126 = vadd.xlane.f32.xlu0 %v125
    %v127 = vpop.xlane.xlu0 %126
    %v128 = vsel %vm75, %v112, 0.0
    %129 = vadd.xlane.f32.xlu0 %v128
    %v130 = vpop.xlane.xlu0 %129
    %v131 = vsel %vm75, %v114, 0.0
    %132 = vadd.xlane.f32.xlu0 %v131
    %v133 = vpop.xlane.xlu0 %132
    %v134 = vsel %vm75, %v116, 0.0
    %135 = vadd.xlane.f32.xlu0 %v134
    %v136 = vpop.xlane.xlu0 %135
    %v137 = vsel %vm94, %v118, 0.0
    %138 = vadd.xlane.f32.xlu0 %v137
    %v139 = vpop.xlane.xlu0 %138
    %v140 = vlog2.pop %v121
    %v141 = vmul.f32 %v140, 0.6931472
    %v142 = vlog2.pop %v124
    %v143 = vmul.f32 %v142, 0.6931472
    %v144 = vlog2.pop %v127
    %v145 = vmul.f32 %v144, 0.6931472
    %v146 = vlog2.pop %v130
    %v147 = vmul.f32 %v146, 0.6931472
    %v148 = vlog2.pop %v133
    %v149 = vmul.f32 %v148, 0.6931472
    %v150 = vlog2.pop %v136
    %v151 = vmul.f32 %v150, 0.6931472
    %v152 = vlog2.pop %v139
    %v153 = vmul.f32 %v152, 0.6931472
    %v154 = vlaneseq
    %v155 = vand.u32 %v154, 127
    %156 = vset.pattern.permute.xlu0 0
    %157 = vperm.xlu0 %156, %v68
    %v158 = vpop.permute.xlu0 %157
    %159 = vset.pattern.permute.xlu0 0
    %160 = vperm.xlu0 %159, %v69
    %v161 = vpop.permute.xlu0 %160
    %162 = vset.pattern.permute.xlu0 0
    %163 = vperm.xlu0 %162, %v70
    %v164 = vpop.permute.xlu0 %163
    %165 = vset.pattern.permute.xlu0 0
    %166 = vperm.xlu0 %165, %v71
    %v167 = vpop.permute.xlu0 %166
    %168 = vset.pattern.permute.xlu0 0
    %169 = vperm.xlu0 %168, %v72
    %v170 = vpop.permute.xlu0 %169
    %171 = vset.pattern.permute.xlu0 0
    %172 = vperm.xlu0 %171, %v73
    %v173 = vpop.permute.xlu0 %172
    %174 = vset.pattern.permute.xlu0 0
    %175 = vperm.xlu0 %174, %v74
    %v176 = vpop.permute.xlu0 %175
    %vm177 = vcmp.eq.s32.totalorder %v155, %v158
    %vm178 = vcmp.eq.s32.totalorder %v155, %v161
    %vm179 = vcmp.eq.s32.totalorder %v155, %v164
    %vm180 = vcmp.eq.s32.totalorder %v155, %v167
    %vm181 = vcmp.eq.s32.totalorder %v155, %v170
    %vm182 = vcmp.eq.s32.totalorder %v155, %v173
    %vm183 = vcmp.eq.s32.totalorder %v155, %v176
    %v184 = vsel %vm177, %v98, 0.0
    %v185 = vsel %vm178, %v99, 0.0
    %v186 = vsel %vm179, %v100, 0.0
    %v187 = vsel %vm180, %v101, 0.0
    %v188 = vsel %vm181, %v102, 0.0
    %v189 = vsel %vm182, %v103, 0.0
    %v190 = vsel %vm183, %v104, 0.0
    %v191 = vsel %vm75, %v184, 0.0
    %192 = vadd.xlane.f32.xlu0 %v191
    %v193 = vpop.xlane.xlu0 %192
    %v194 = vsel %vm75, %v185, 0.0
    %195 = vadd.xlane.f32.xlu0 %v194
    %v196 = vpop.xlane.xlu0 %195
    %v197 = vsel %vm75, %v186, 0.0
    %198 = vadd.xlane.f32.xlu0 %v197
    %v199 = vpop.xlane.xlu0 %198
    %v200 = vsel %vm75, %v187, 0.0
    %201 = vadd.xlane.f32.xlu0 %v200
    %v202 = vpop.xlane.xlu0 %201
    %v203 = vsel %vm75, %v188, 0.0
    %204 = vadd.xlane.f32.xlu0 %v203
    %v205 = vpop.xlane.xlu0 %204
    %v206 = vsel %vm75, %v189, 0.0
    %207 = vadd.xlane.f32.xlu0 %v206
    %v208 = vpop.xlane.xlu0 %207
    %v209 = vsel %vm94, %v190, 0.0
    %210 = vadd.xlane.f32.xlu0 %v209
    %v211 = vpop.xlane.xlu0 %210
    %v212 = vsub.f32 %v141, %v193
    %v213 = vsub.f32 %v143, %v196
    %v214 = vsub.f32 %v145, %v199
    %v215 = vsub.f32 %v147, %v202
    %v216 = vsub.f32 %v149, %v205
    %v217 = vsub.f32 %v151, %v208
    %v218 = vsub.f32 %v153, %v211
    %v219 = vld [vmem:[#allocation2] sm:$0x1]
    %v220 = vadd.f32 %v212, %v213
    %v221 = vadd.f32 %v220, %v214
    %v222 = vadd.f32 %v221, %v215
    %v223 = vadd.f32 %v222, %v216
    %v224 = vadd.f32 %v223, %v217
    %vm225 = vcmask 1041408
    %v226 = vsel %vm225, %v218, 0.0
    %v227 = vadd.f32 %v224, %v226
    %v228 = vrot.slane %v227, 4
    %v229 = vadd.f32 %v227, %v228
    %v230 = vrot.slane %v229, 2
    %v231 = vadd.f32 %v229, %v230
    %v232 = vrot.slane %v231, 1
    %v233 = vadd.f32 %v231, %v232
    %v234 = vadd.f32 %v219, %v233
    %235 = vst [vmem:[#allocation2] sm:$0x1] %v234
    // Predicated region
    $region14: #{tpu_custom_call.1} parent=1 // pred_check
      _
    $region15: #{tpu_custom_call.1} parent=1 // pred_check_branch
      %237 = sbr.rel (0) target = $region17
    $region16: #{tpu_custom_call.1} parent=1 // pred_region
      %239 = vsyncadd [#allocation3], 0
      %s241 = sshll.u32 [#allocation2], 4
      %s242 = int_to_ptr.vmem [resolvable:$true] %s241
      %s243 = sshll.u32 %s2, 4
      %s244 = int_to_ptr.hbm [resolvable:$true] %s243
      %246 = dma.vmem_to_hbm [thread:$0]  %s242, 16, %s244, [#allocation3]
    $region17: #{tpu_custom_call.1} parent=1 // pred_fallthru
      _
    // Predicated region
    $region18: #{tpu_custom_call.1} parent=1 // pred_check
      _
    $region19: #{tpu_custom_call.1} parent=1 // pred_check_branch
      %248 = sbr.rel (0) target = $region21
    $region20: #{tpu_custom_call.1} parent=1 // pred_region
      %250 = dma.done [#allocation3], 16
    $region21: #{tpu_custom_call.1} parent=1 // pred_fallthru
      _
    %251 = vsyncpa [#allocation3], 1

</llo_original>
